<compile_context>
chip_gen: v6e
topology: v6e:2x2x1
jax: 0.10.0
libtpu: 0.0.40
codegen_flags: <defaults>
</compile_context>

<pallas_src>
import functools

import jax
import jax.numpy as jnp
from jax.experimental import pallas as pl
from jax.experimental.pallas import tpu as pltpu


_VMEM_LIMIT_BYTES = 32 * 1024 * 1024


def _x_block_byte_budget():
    """Per-generation x-block byte budget (perf-review items on v5e/v6e/v7x)."""
    try:
        phys_vmem = pltpu.get_tpu_info().vmem_capacity_bytes
    except Exception:  # conservative default if the query is unavailable
        phys_vmem = 64 * 1024 * 1024
    # v5e / v6e: 128 MiB physical VMEM -> larger blocks approach HBM roofline.
    # v7x: 64 MiB physical (32 MiB scoped) -> keep blocks ~3 MiB so that
    # (input + output), double buffered, stays well under the scoped limit.
    return (6 << 20) if phys_vmem >= (100 << 20) else (3 << 20)


# ------------------------------ Pallas kernels -------------------------------

def _fused_ca_kernel(x_ref, w1_ref, b1_ref, w2_ref, b2_ref, o_ref):
    """One batch element per grid step: pool -> FC1 -> ReLU -> FC2 -> sigmoid -> scale.

    x_ref / o_ref blocks are (1, C, S); weights are tiny resident operands.
    All gate math is done on column vectors, so no transposes are needed.
    """
    s = x_ref.shape[-1]
    x = x_ref[0]                                                          # (C, S) native dtype
    pooled = jnp.sum(x.astype(jnp.float32), axis=-1, keepdims=True) * (1.0 / s)   # (C, 1)
    h = jnp.dot(w1_ref[...], pooled, preferred_element_type=jnp.float32) + b1_ref[...]
    h = jnp.maximum(h, 0.0)                                               # (C//r, 1)
    g = jax.nn.sigmoid(
        jnp.dot(w2_ref[...], h, preferred_element_type=jnp.float32) + b2_ref[...])  # (C, 1)
    # Gate broadcast over lanes happens in VMEM; output written directly in x.dtype.
    o_ref[0] = (x_ref[0].astype(jnp.float32) * g).astype(o_ref.dtype)


def _mean_kernel(x_ref, p_ref):
    """(1, cb, S) block -> per-channel spatial mean (1, cb, 1), f32 accumulation."""
    s = x_ref.shape[-1]
    p_ref[...] = jnp.sum(x_ref[...].astype(jnp.float32), axis=-1,
                         keepdims=True) * (1.0 / s)


def _gate_mul_kernel(p_ref, w1_ref, b1_ref, w2_ref, b2_ref, x_ref, o_ref, g_scr):
    """Fused FC gate + gating multiply for the two-pass fallback.

    Grid is (batch, channel_block).  The (C_pad, 1) gate for the current batch
    is computed once per batch (pl.when on channel-block 0) into VMEM scratch;
    every step then scales its (cb, S) x block by the matching scratch slice.
    """
    cb = x_ref.shape[1]
    j = pl.program_id(1)

    @pl.when(j == 0)
    def _():
        pooled = p_ref[0]                                                 # (C, 1)
        h = jnp.dot(w1_ref[...], pooled, preferred_element_type=jnp.float32) + b1_ref[...]
        h = jnp.maximum(h, 0.0)
        g_scr[...] = jax.nn.sigmoid(
            jnp.dot(w2_ref[...], h, preferred_element_type=jnp.float32) + b2_ref[...])

    start = pl.multiple_of(j * cb, 8)     # cb is a multiple of 8 whenever j can be > 0
    g = g_scr[pl.ds(start, cb), :]                                        # (cb, 1)
    o_ref[0] = (x_ref[0].astype(jnp.float32) * g).astype(o_ref.dtype)


# -------------------------------- module --------------------------------------

def init_params(key, in_channels, reduction_ratio=8):
    hidden = in_channels // reduction_ratio
    k1, k2, k3, k4 = jax.random.split(key, 4)
    scale = 0.05
    w1 = scale * jax.random.normal(k1, (hidden, in_channels), jnp.float32)
    b1 = scale * jax.random.normal(k2, (hidden,), jnp.float32)
    w2 = scale * jax.random.normal(k3, (in_channels, hidden), jnp.float32)
    b2 = scale * jax.random.normal(k4, (in_channels,), jnp.float32)
    # PyTorch-native Linear layouts; biases stored once as column vectors so the
    # in-kernel gate math is pure column matvecs (no per-call transposes/pads).
    return dict(w1=w1, b1=b1.reshape(hidden, 1),
                w2=w2, b2=b2.reshape(in_channels, 1))


def channel_attention_module(x, params, *, force_two_pass=False, channel_block=None):
    """Forward pass of ChannelAttentionModule.  x: (B, C, D, H, W)."""
    B, C, D, H, W = x.shape
    S = D * H * W
    in_bytes = x.dtype.itemsize
    out_dtype = x.dtype

    # Contiguous collapse of trailing spatial dims: metadata-only, no HBM copy.
    x3 = x.reshape(B, C, S)
    w1, b1 = params["w1"], params["b1"]          # (C//r, C), (C//r, 1)
    w2, b2 = params["w2"], params["b2"]          # (C, C//r), (C, 1)
    hidden = w1.shape[0]

    budget = _x_block_byte_budget()
    slab_bytes = C * S * 2 * in_bytes            # one batch slab, input + output

    def _cparams(sem):
        return pltpu.CompilerParams(dimension_semantics=sem,
                                    vmem_limit_bytes=_VMEM_LIMIT_BYTES)

    # ---------- primary path: fully fused, one read + one write of x ----------
    if not force_two_pass and slab_bytes <= 2 * budget:
        out3 = pl.pallas_call(
            _fused_ca_kernel,
            out_shape=jax.ShapeDtypeStruct((B, C, S), out_dtype),
            grid=(B,),
            in_specs=[
                pl.BlockSpec((1, C, S), lambda b: (b, 0, 0)),   # x slab for batch b
                pl.BlockSpec((hidden, C), lambda b: (0, 0)),    # resident weights/biases
                pl.BlockSpec((hidden, 1), lambda b: (0, 0)),
                pl.BlockSpec((C, hidden), lambda b: (0, 0)),
                pl.BlockSpec((C, 1), lambda b: (0, 0)),
            ],
            out_specs=pl.BlockSpec((1, C, S), lambda b: (b, 0, 0)),
            compiler_params=_cparams(("parallel",)),
        )(x3, w1, b1, w2, b2)
        return out3.reshape(B, C, D, H, W)

    # ---------- fallback: per-batch slab does not fit VMEM -> two passes ------
    # Channel-block size: multiple of 8 (or the full C), sized to the budget.
    if channel_block is not None:
        cb = C if channel_block >= C else max(8, (channel_block // 8) * 8)
    elif C <= 8 or C * S * in_bytes <= budget:
        cb = C
    else:
        cb = max(8, (budget // (S * in_bytes)) // 8 * 8)
    # TODO(synk): if even a single 8-channel slab exceeds VMEM (gigantic S),
    # spatial tiling of the reduction would be needed; not required here.
    n_cb = -(-C // cb)
    grid2 = (B, n_cb)

    # Pass 1: per-(b, c) spatial mean; reads x once, emits only (B, C, 1) f32.
    pooled = pl.pallas_call(
        _mean_kernel,
        out_shape=jax.ShapeDtypeStruct((B, C, 1), jnp.float32),
        grid=grid2,
        in_specs=[pl.BlockSpec((1, cb, S), lambda b, j: (b, j, 0))],
        out_specs=pl.BlockSpec((1, cb, 1), lambda b, j: (b, j, 0)),
        compiler_params=_cparams(("parallel", "parallel")),
    )(x3)

    # Pad FC2 rows so the in-kernel gate fills the whole (C_pad, 1) scratch even
    # when cb does not divide C (padded gate rows are never written back).
    c_pad = n_cb * cb
    if c_pad != C:
        w2k = jnp.pad(w2, ((0, c_pad - C), (0, 0)))
        b2k = jnp.pad(b2, ((0, c_pad - C), (0, 0)))
    else:
        w2k, b2k = w2, b2

    # Pass 2: fused FC gate (once per batch, into VMEM scratch) + gating multiply.
    out3 = pl.pallas_call(
        _gate_mul_kernel,
        out_shape=jax.ShapeDtypeStruct((B, C, S), out_dtype),
        grid=grid2,
        in_specs=[
            pl.BlockSpec((1, C, 1), lambda b, j: (b, 0, 0)),    # pooled column, resident per batch
            pl.BlockSpec((hidden, C), lambda b, j: (0, 0)),
            pl.BlockSpec((hidden, 1), lambda b, j: (0, 0)),
            pl.BlockSpec((c_pad, hidden), lambda b, j: (0, 0)),
            pl.BlockSpec((c_pad, 1), lambda b, j: (0, 0)),
            pl.BlockSpec((1, cb, S), lambda b, j: (b, j, 0)),
        ],
        out_specs=pl.BlockSpec((1, cb, S), lambda b, j: (b, j, 0)),
        scratch_shapes=[pltpu.VMEM((c_pad, 1), jnp.float32)],
        compiler_params=_cparams(("parallel", "arbitrary")),
    )(pooled, w1, b1, w2k, b2k, x3)

    return out3.reshape(B, C, D, H, W)


def reference(x, params):
    B, C = x.shape[:2]
    xf = x.astype(jnp.float32)
    y = jnp.mean(xf, axis=(2, 3, 4))                                     # (B, C)
    h = jnp.maximum(y @ params["w1"].T + params["b1"][:, 0], 0.0)
    g = jax.nn.sigmoid(h @ params["w2"].T + params["b2"][:, 0])
    return (xf * g.reshape(B, C, 1, 1, 1)).astype(x.dtype)


if __name__ == "__main__":
    key = jax.random.PRNGKey(0)
    kx, kp = jax.random.split(key)

    B, C, D, H, W = 2, 64, 8, 8, 8            # D*H*W = 512 -> lane-dense blocks
    x = jax.random.normal(kx, (B, C, D, H, W), jnp.float32)
    params = init_params(kp, in_channels=C, reduction_ratio=8)

    ref = reference(x, params)

    # Fully fused single-kernel path (the default at this size).
    out = jax.block_until_ready(jax.jit(channel_attention_module)(x, params))
    assert out.shape == x.shape and out.dtype == x.dtype
    assert bool(jnp.all(jnp.isfinite(out)))
    err = float(jnp.max(jnp.abs(out - ref)))
    assert err < 1e-4, err

    # Two-pass fallback (used when a per-batch slab exceeds VMEM); forced and
    # channel-blocked here so that code path is exercised and validated too.
    two_pass = jax.jit(functools.partial(channel_attention_module,
                                         force_two_pass=True, channel_block=16))
    out2 = jax.block_until_ready(two_pass(x, params))
    err2 = float(jnp.max(jnp.abs(out2 - ref)))
    assert err2 < 1e-4, err2

    # Native-dtype handling: bf16 stays bf16 through HBM, f32 accumulation inside.
    xb = x.astype(jnp.bfloat16)
    outb = jax.block_until_ready(jax.jit(channel_attention_module)(xb, params))
    assert outb.dtype == jnp.bfloat16
    errb = float(jnp.max(jnp.abs(outb.astype(jnp.float32)
                                 - reference(xb, params).astype(jnp.float32))))
    assert errb < 5e-2, errb

    print("KERNEL_OK")
</pallas_src>

<mosaic_0001>
module attributes {stable_mosaic.version = 11 : i64} {
  func.func @_fused_ca_kernel(%arg0: i32, %arg1: memref<1x64x512xf32, #tpu.memory_space<vmem>>, %arg2: memref<8x64xf32, #tpu.memory_space<vmem>>, %arg3: memref<8x1xf32, #tpu.memory_space<vmem>>, %arg4: memref<64x8xf32, #tpu.memory_space<vmem>>, %arg5: memref<64x1xf32, #tpu.memory_space<vmem>>, %arg6: memref<1x64x512xf32, #tpu.memory_space<vmem>>) attributes {dimension_semantics = [#tpu.dimension_semantics<parallel>], iteration_bounds = array<i64: 2>, scalar_prefetch = 0 : i64, scratch_operands = 0 : i64, tpu.core_type = #tpu.core_type<tc>, window_params = [{transform_indices = @transform_0, window_bounds = array<i64: 1, 64, 512>}, {pipeline_mode = #tpu.pipeline_mode<synchronous>, transform_indices = @transform_1, window_bounds = array<i64: 8, 64>}, {pipeline_mode = #tpu.pipeline_mode<synchronous>, transform_indices = @transform_2, window_bounds = array<i64: 8, 1>}, {pipeline_mode = #tpu.pipeline_mode<synchronous>, transform_indices = @transform_3, window_bounds = array<i64: 64, 8>}, {pipeline_mode = #tpu.pipeline_mode<synchronous>, transform_indices = @transform_4, window_bounds = array<i64: 64, 1>}, {transform_indices = @transform_5, window_bounds = array<i64: 1, 64, 512>}]} {
    %c0 = arith.constant 0 : index
    %c0_0 = arith.constant 0 : index
    %c0_1 = arith.constant 0 : index
    %0 = vector.load %arg1[%c0, %c0_0, %c0_1] : memref<1x64x512xf32, #tpu.memory_space<vmem>>, vector<1x64x512xf32>
    %1 = vector.shape_cast %0 : vector<1x64x512xf32> to vector<64x512xf32>
    %cst = arith.constant dense<0.000000e+00> : vector<64xf32>
    %2 = vector.multi_reduction <add>, %1, %cst [1] : vector<64x512xf32> to vector<64xf32>
    %3 = vector.shape_cast %2 : vector<64xf32> to vector<64x1xf32>
    %cst_2 = arith.constant 0.001953125 : f32
    %4 = vector.broadcast %cst_2 : f32 to vector<64x1xf32>
    %5 = arith.mulf %3, %4 : vector<64x1xf32>
    %c0_3 = arith.constant 0 : index
    %c0_4 = arith.constant 0 : index
    %6 = vector.load %arg2[%c0_3, %c0_4] : memref<8x64xf32, #tpu.memory_space<vmem>>, vector<8x64xf32>
    %cst_5 = arith.constant dense<0.000000e+00> : vector<8x1xf32>
    %7 = tpu.matmul %6, %5, %cst_5 {dimension_numbers = #tpu.dot_dimension_numbers<[1], [0], [0], [1], [0, 0, 1, 1], [], []>} : vector<8x64xf32>, vector<64x1xf32>, vector<8x1xf32> -> vector<8x1xf32>
    %c0_6 = arith.constant 0 : index
    %c0_7 = arith.constant 0 : index
    %8 = vector.load %arg3[%c0_6, %c0_7] : memref<8x1xf32, #tpu.memory_space<vmem>>, vector<8x1xf32>
    %9 = arith.addf %7, %8 : vector<8x1xf32>
    %cst_8 = arith.constant 0.000000e+00 : f32
    %10 = vector.broadcast %cst_8 : f32 to vector<8x1xf32>
    %11 = arith.maximumf %9, %10 : vector<8x1xf32>
    %c0_9 = arith.constant 0 : index
    %c0_10 = arith.constant 0 : index
    %12 = vector.load %arg4[%c0_9, %c0_10] : memref<64x8xf32, #tpu.memory_space<vmem>>, vector<64x8xf32>
    %cst_11 = arith.constant dense<0.000000e+00> : vector<64x1xf32>
    %13 = tpu.matmul %12, %11, %cst_11 {dimension_numbers = #tpu.dot_dimension_numbers<[1], [0], [0], [1], [0, 0, 1, 1], [], []>} : vector<64x8xf32>, vector<8x1xf32>, vector<64x1xf32> -> vector<64x1xf32>
    %c0_12 = arith.constant 0 : index
    %c0_13 = arith.constant 0 : index
    %14 = vector.load %arg5[%c0_12, %c0_13] : memref<64x1xf32, #tpu.memory_space<vmem>>, vector<64x1xf32>
    %15 = arith.addf %13, %14 : vector<64x1xf32>
    %16 = arith.negf %15 : vector<64x1xf32>
    %17 = math.exp %16 : vector<64x1xf32>
    %cst_14 = arith.constant 1.000000e+00 : f32
    %18 = vector.broadcast %cst_14 : f32 to vector<64x1xf32>
    %19 = arith.addf %18, %17 : vector<64x1xf32>
    %20 = arith.divf %18, %19 : vector<64x1xf32>
    %c0_15 = arith.constant 0 : index
    %c0_16 = arith.constant 0 : index
    %c0_17 = arith.constant 0 : index
    %21 = vector.load %arg1[%c0_15, %c0_16, %c0_17] : memref<1x64x512xf32, #tpu.memory_space<vmem>>, vector<1x64x512xf32>
    %22 = vector.shape_cast %21 : vector<1x64x512xf32> to vector<64x512xf32>
    %23 = vector.broadcast %20 : vector<64x1xf32> to vector<64x512xf32>
    %24 = arith.mulf %22, %23 : vector<64x512xf32>
    %c0_18 = arith.constant 0 : index
    %c0_19 = arith.constant 0 : index
    %c0_20 = arith.constant 0 : index
    %25 = vector.load %arg6[%c0_18, %c0_19, %c0_20] : memref<1x64x512xf32, #tpu.memory_space<vmem>>, vector<1x64x512xf32>
    %26 = vector.shape_cast %25 : vector<1x64x512xf32> to vector<64x512xf32>
    %27 = vector.shape_cast %24 : vector<64x512xf32> to vector<1x64x512xf32>
    tpu.vector_store %arg6[%c0_18, %c0_19, %c0_20], %27 {strides = array<i32>} : memref<1x64x512xf32, #tpu.memory_space<vmem>>, vector<1x64x512xf32>,
    return
  }
  func.func @transform_0(%arg0: i32) -> (i32, i32, i32) {
    %c0_i32 = arith.constant 0 : i32
    %c0_i32_0 = arith.constant 0 : i32
    %c0_i32_1 = arith.constant 0 : i32
    return %arg0, %c0_i32, %c0_i32_0 : i32, i32, i32
  }
  func.func @transform_1(%arg0: i32) -> (i32, i32) {
    %c0_i32 = arith.constant 0 : i32
    %c0_i32_0 = arith.constant 0 : i32
    %c0_i32_1 = arith.constant 0 : i32
    return %c0_i32, %c0_i32_0 : i32, i32
  }
  func.func @transform_2(%arg0: i32) -> (i32, i32) {
    %c0_i32 = arith.constant 0 : i32
    %c0_i32_0 = arith.constant 0 : i32
    %c0_i32_1 = arith.constant 0 : i32
    return %c0_i32, %c0_i32_0 : i32, i32
  }
  func.func @transform_3(%arg0: i32) -> (i32, i32) {
    %c0_i32 = arith.constant 0 : i32
    %c0_i32_0 = arith.constant 0 : i32
    %c0_i32_1 = arith.constant 0 : i32
    return %c0_i32, %c0_i32_0 : i32, i32
  }
  func.func @transform_4(%arg0: i32) -> (i32, i32) {
    %c0_i32 = arith.constant 0 : i32
    %c0_i32_0 = arith.constant 0 : i32
    %c0_i32_1 = arith.constant 0 : i32
    return %c0_i32, %c0_i32_0 : i32, i32
  }
  func.func @transform_5(%arg0: i32) -> (i32, i32, i32) {
    %c0_i32 = arith.constant 0 : i32
    %c0_i32_0 = arith.constant 0 : i32
    %c0_i32_1 = arith.constant 0 : i32
    return %arg0, %c0_i32, %c0_i32_0 : i32, i32, i32
  }
}

</mosaic_0001>

<llo_original>
// kernel: channel_attention_module.1
$region0: #{channel_attention_module.1}
  #allocation0 [shape = 'u32[]', space=smem, size = 0x4, offset = 0x4, fixed_abs, tag = 'smem constant byte address 0x4 - core index']
  #allocation1 [shape = 'u32[144,128]{1,0:T(1,128)}', space=vmem, size = 0x12000, scoped, tag = 'internal scratch']
  %s0 = inlined_call_operand.vmem [shape: f32[2,64,512], index: 0, kind: input, shape index: {}]
  %s1 = inlined_call_operand.vmem [shape: f32[8,64], index: 1, kind: input, shape index: {}]
  %s2 = inlined_call_operand.vmem [shape: f32[8,1], index: 2, kind: input, shape index: {}]
  %s3 = inlined_call_operand.vmem [shape: f32[64,8], index: 3, kind: input, shape index: {}]
  %s4 = inlined_call_operand.vmem [shape: f32[64,1], index: 4, kind: input, shape index: {}]
  %s5 = inlined_call_operand.vmem [shape: f32[2,64,512], index: 5, kind: output, shape index: {}]
  %s6 = sld [smem:[#allocation0]]
  $region53: #{channel_attention_module.1} parent=0
    _
  %s8 = ssub.s32 1, %s6
  %s9 = scalar_select 0, %s8, %s6
  loop: start=0, step=1, limit=4
  $region2: #{channel_attention_module.1} parent=0 // loop_pre_header
    _
  $region3: #{channel_attention_module.1} parent=0 // loop_header
    %s11 = sphi 0, %s15
    %p12 = scmp.ge.s32.totalorder %s11, 4
    %s21 = sphi 0, %s23
    %s24 = sphi 0, %s21
    %s25 = sphi 0, %s24
    %s41 = sphi 0, %s25
    %s45 = sphi 0, %s45
    %s47 = sphi 0, %s45
    %s48 = sphi 0, %s47
    %s62 = sphi 0, %s48
    %s66 = sphi 0, %s66
    %s68 = sphi 0, %s66
    %s69 = sphi 0, %s68
    %s83 = sphi 0, %s69
    %s87 = sphi 0, %s87
    %s89 = sphi 0, %s87
    %s90 = sphi 0, %s89
    %s104 = sphi 0, %s90
    %s108 = sphi 0, %s108
    %s110 = sphi 0, %s108
    %s111 = sphi 0, %s110
    %s125 = sphi 0, %s111
    %s131 = sphi 0, %s133
    %s134 = sphi 0, %s131
    %s135 = sphi 0, %s134
    %s151 = sphi 0, %s135
  $region4: #{channel_attention_module.1} parent=0 // loop_header_branch
    %14 = sbr.rel (%p12) target = $region8
  $region5: #{channel_attention_module.1} parent=0 // loop_body
    %s16 = ssub.s32 %s11, 1
    %s17 = ssub.s32 %s11, 2
    %s18 = sadd.s32 %s11, 1
    %s19 = ssub.s32 %s11, %s18
    %p20 = scmp.eq.s32.totalorder %s19, 0
    %s22 = sadd.s32 %s21, 1
    %s23 = scalar_select %p20, %s21, %s22
    %p26 = pneg %p20
    %p27 = scmp.eq.s32.totalorder %s11, 1
    %p28 = por %p26, %p27
    %p29 = scmp.ne.s32.totalorder %s21, %s24
    %p30 = scmp.eq.s32.totalorder %s11, 0
    %p31 = por %p29, %p30
    %p32 = scmp.ne.s32.totalorder %s21, %s24
    %p33 = scmp.eq.s32.totalorder %s16, 1
    %p34 = por %p32, %p33
    %p35 = scmp.ne.s32.totalorder %s24, %s25
    %p36 = scmp.eq.s32.totalorder %s16, 0
    %p37 = por %p35, %p36
    %p38 = scmp.ne.s32.totalorder %s24, %s25
    %p39 = scmp.eq.s32.totalorder %s17, 1
    %p40 = por %p38, %p39
    %p42 = scmp.ne.s32.totalorder %s25, %s41
    %p43 = scmp.eq.s32.totalorder %s17, 0
    %p44 = por %p42, %p43
    %s46 = sadd.s32 %s45, 1
    %p49 = scmp.eq.s32.totalorder %s11, 1
    %p50 = scmp.ne.s32.totalorder %s45, %s47
    %p51 = scmp.eq.s32.totalorder %s11, 0
    %p52 = por %p50, %p51
    %p53 = scmp.ne.s32.totalorder %s45, %s47
    %p54 = scmp.eq.s32.totalorder %s16, 1
    %p55 = por %p53, %p54
    %p56 = scmp.ne.s32.totalorder %s47, %s48
    %p57 = scmp.eq.s32.totalorder %s16, 0
    %p58 = por %p56, %p57
    %p59 = scmp.ne.s32.totalorder %s47, %s48
    %p60 = scmp.eq.s32.totalorder %s17, 1
    %p61 = por %p59, %p60
    %p63 = scmp.ne.s32.totalorder %s48, %s62
    %p64 = scmp.eq.s32.totalorder %s17, 0
    %p65 = por %p63, %p64
    %s67 = sadd.s32 %s66, 1
    %p70 = scmp.eq.s32.totalorder %s11, 1
    %p71 = scmp.ne.s32.totalorder %s66, %s68
    %p72 = scmp.eq.s32.totalorder %s11, 0
    %p73 = por %p71, %p72
    %p74 = scmp.ne.s32.totalorder %s66, %s68
    %p75 = scmp.eq.s32.totalorder %s16, 1
    %p76 = por %p74, %p75
    %p77 = scmp.ne.s32.totalorder %s68, %s69
    %p78 = scmp.eq.s32.totalorder %s16, 0
    %p79 = por %p77, %p78
    %p80 = scmp.ne.s32.totalorder %s68, %s69
    %p81 = scmp.eq.s32.totalorder %s17, 1
    %p82 = por %p80, %p81
    %p84 = scmp.ne.s32.totalorder %s69, %s83
    %p85 = scmp.eq.s32.totalorder %s17, 0
    %p86 = por %p84, %p85
    %s88 = sadd.s32 %s87, 1
    %p91 = scmp.eq.s32.totalorder %s11, 1
    %p92 = scmp.ne.s32.totalorder %s87, %s89
    %p93 = scmp.eq.s32.totalorder %s11, 0
    %p94 = por %p92, %p93
    %p95 = scmp.ne.s32.totalorder %s87, %s89
    %p96 = scmp.eq.s32.totalorder %s16, 1
    %p97 = por %p95, %p96
    %p98 = scmp.ne.s32.totalorder %s89, %s90
    %p99 = scmp.eq.s32.totalorder %s16, 0
    %p100 = por %p98, %p99
    %p101 = scmp.ne.s32.totalorder %s89, %s90
    %p102 = scmp.eq.s32.totalorder %s17, 1
    %p103 = por %p101, %p102
    %p105 = scmp.ne.s32.totalorder %s90, %s104
    %p106 = scmp.eq.s32.totalorder %s17, 0
    %p107 = por %p105, %p106
    %s109 = sadd.s32 %s108, 1
    %p112 = scmp.eq.s32.totalorder %s11, 1
    %p113 = scmp.ne.s32.totalorder %s108, %s110
    %p114 = scmp.eq.s32.totalorder %s11, 0
    %p115 = por %p113, %p114
    %p116 = scmp.ne.s32.totalorder %s108, %s110
    %p117 = scmp.eq.s32.totalorder %s16, 1
    %p118 = por %p116, %p117
    %p119 = scmp.ne.s32.totalorder %s110, %s111
    %p120 = scmp.eq.s32.totalorder %s16, 0
    %p121 = por %p119, %p120
    %p122 = scmp.ne.s32.totalorder %s110, %s111
    %p123 = scmp.eq.s32.totalorder %s17, 1
    %p124 = por %p122, %p123
    %p126 = scmp.ne.s32.totalorder %s111, %s125
    %p127 = scmp.eq.s32.totalorder %s17, 0
    %p128 = por %p126, %p127
    %s129 = ssub.s32 %s11, %s18
    %p130 = scmp.eq.s32.totalorder %s129, 0
    %s132 = sadd.s32 %s131, 1
    %s133 = scalar_select %p130, %s131, %s132
    %p136 = pneg %p130
    %p137 = scmp.eq.s32.totalorder %s11, 1
    %p138 = por %p136, %p137
    %p139 = scmp.ne.s32.totalorder %s131, %s134
    %p140 = scmp.eq.s32.totalorder %s11, 0
    %p141 = por %p139, %p140
    %p142 = scmp.ne.s32.totalorder %s131, %s134
    %p143 = scmp.eq.s32.totalorder %s16, 1
    %p144 = por %p142, %p143
    %p145 = scmp.ne.s32.totalorder %s134, %s135
    %p146 = scmp.eq.s32.totalorder %s16, 0
    %p147 = por %p145, %p146
    %p148 = scmp.ne.s32.totalorder %s134, %s135
    %p149 = scmp.eq.s32.totalorder %s17, 1
    %p150 = por %p148, %p149
    %p152 = scmp.ne.s32.totalorder %s135, %s151
    %p153 = scmp.eq.s32.totalorder %s17, 0
    %p154 = por %p152, %p153
    %p155 = scmp.le.s32.totalorder 1, %s11
    %p156 = scmp.lt.s32.totalorder %s11, 3
    %p157 = pnand %p155, %p156
    %p158 = pneg %p157
    // Predicated region
    $region9: #{channel_attention_module.1} parent=5 // pred_check
      _
    $region10: #{channel_attention_module.1} parent=5 // pred_check_branch
      %160 = sbr.rel (%p157) target = $region12
    $region11: #{channel_attention_module.1} parent=5 // pred_region
      %s161 = ssub.s32 %s11, 1
      // Predicated region
      $region13: #{channel_attention_module.1} parent=11 // pred_check
        %p162 = pneg %p58
      $region14: #{channel_attention_module.1} parent=11 // pred_check_branch
        %164 = sbr.rel (%p162) target = $region16
      $region15: #{channel_attention_module.1} parent=11 // pred_region
        _
      $region16: #{channel_attention_module.1} parent=11 // pred_fallthru
        _
      // Predicated region
      $region17: #{channel_attention_module.1} parent=11 // pred_check
        %p165 = pneg %p79
      $region18: #{channel_attention_module.1} parent=11 // pred_check_branch
        %167 = sbr.rel (%p165) target = $region20
      $region19: #{channel_attention_module.1} parent=11 // pred_region
        _
      $region20: #{channel_attention_module.1} parent=11 // pred_fallthru
        _
      // Predicated region
      $region21: #{channel_attention_module.1} parent=11 // pred_check
        %p168 = pneg %p100
      $region22: #{channel_attention_module.1} parent=11 // pred_check_branch
        %170 = sbr.rel (%p168) target = $region24
      $region23: #{channel_attention_module.1} parent=11 // pred_region
        _
      $region24: #{channel_attention_module.1} parent=11 // pred_fallthru
        _
      // Predicated region
      $region25: #{channel_attention_module.1} parent=11 // pred_check
        %p171 = pneg %p121
      $region26: #{channel_attention_module.1} parent=11 // pred_check_branch
        %173 = sbr.rel (%p171) target = $region28
      $region27: #{channel_attention_module.1} parent=11 // pred_region
        _
      $region28: #{channel_attention_module.1} parent=11 // pred_fallthru
        _
    $region12: #{channel_attention_module.1} parent=5 // pred_fallthru
      _
    %p174 = scmp.lt.s32.totalorder %s11, 2
    // Predicated region
    $region29: #{channel_attention_module.1} parent=5 // pred_check
      %p175 = pneg %p174
    $region30: #{channel_attention_module.1} parent=5 // pred_check_branch
      %177 = sbr.rel (%p175) target = $region32
    $region31: #{channel_attention_module.1} parent=5 // pred_region
      // Predicated region
      $region33: #{channel_attention_module.1} parent=31 // pred_check
        %p178 = pneg %p31
      $region34: #{channel_attention_module.1} parent=31 // pred_check_branch
        %180 = sbr.rel (%p178) target = $region36
      $region35: #{channel_attention_module.1} parent=31 // pred_region
        %p181 = scmp.lt.s32.totalorder %s11, 1
        %s182 = scalar_select %p181, %s11, 1
        %s183 = smul.addr %s182, 32
        %s184 = smul.addr %s183, 8
        %s185 = scalar_lea.vmem %s0, %s184
      $region36: #{channel_attention_module.1} parent=31 // pred_fallthru
        _
    $region32: #{channel_attention_module.1} parent=5 // pred_fallthru
      _
    %p186 = scmp.le.s32.totalorder 1, %s11
    %p187 = scmp.lt.s32.totalorder %s11, 3
    %p188 = pnand %p186, %p187
    %p189 = pneg %p188
    // Predicated region
    $region37: #{channel_attention_module.1} parent=5 // pred_check
      _
    $region38: #{channel_attention_module.1} parent=5 // pred_check_branch
      %191 = sbr.rel (%p188) target = $region40
    $region39: #{channel_attention_module.1} parent=5 // pred_region
      %s192 = ssub.s32 %s11, 1
      %p193 = scmp.lt.s32.totalorder %s16, 1
      %s194 = scalar_select %p193, %s16, 1
      %s195 = smul.addr %s194, 32
      %s196 = smul.addr %s195, 8
      %s197 = scalar_lea.vmem %s0, %s196
      %p198 = pneg %p37
      %p199 = pneg %p34
      %p200 = pneg %p58
      %p201 = pneg %p55
      %p202 = pneg %p79
      %p203 = pneg %p76
      %p204 = pneg %p100
      %p205 = pneg %p97
      %p206 = pneg %p121
      %p207 = pneg %p118
      %p208 = pneg %p147
      %p209 = pneg %p144
      %p210 = scmp.lt.s32.totalorder %s16, 1
      %s211 = scalar_select %p210, %s16, 1
      %s212 = smul.addr %s211, 32
      %s213 = smul.addr %s212, 8
      %s214 = scalar_lea.vmem %s5, %s213
      %p215 = scmp.lt.s32.totalorder %s16, 1
      %s216 = scalar_select %p215, %s16, 1
      %s217 = smul.addr %s216, 32
      %s218 = smul.addr %s217, 8
      %s219 = scalar_lea.vmem %s0, %s218
      %p220 = scmp.lt.s32.totalorder %s16, 1
      %s221 = scalar_select %p220, %s16, 1
      %s222 = smul.addr %s221, 32
      %s223 = smul.addr %s222, 8
      %s224 = scalar_lea.vmem %s5, %s223
      %v225 = vld [vmem:[%s219] sm:$0xff]
      %v226 = vld [vmem:[%s219 + $0x8] sm:$0xff]
      %v227 = vld [vmem:[%s219 + $0x10] sm:$0xff]
      %v228 = vld [vmem:[%s219 + $0x18] sm:$0xff]
      %v229 = vld [vmem:[%s219 + $0x20] sm:$0xff]
      %v230 = vld [vmem:[%s219 + $0x28] sm:$0xff]
      %v231 = vld [vmem:[%s219 + $0x30] sm:$0xff]
      %v232 = vld [vmem:[%s219 + $0x38] sm:$0xff]
      %v233 = vld [vmem:[%s219 + $0x40] sm:$0xff]
      %v234 = vld [vmem:[%s219 + $0x48] sm:$0xff]
      %v235 = vld [vmem:[%s219 + $0x50] sm:$0xff]
      %v236 = vld [vmem:[%s219 + $0x58] sm:$0xff]
      %v237 = vld [vmem:[%s219 + $0x60] sm:$0xff]
      %v238 = vld [vmem:[%s219 + $0x68] sm:$0xff]
      %v239 = vld [vmem:[%s219 + $0x70] sm:$0xff]
      %v240 = vld [vmem:[%s219 + $0x78] sm:$0xff]
      %v241 = vld [vmem:[%s219 + $0x80] sm:$0xff]
      %v242 = vld [vmem:[%s219 + $0x88] sm:$0xff]
      %v243 = vld [vmem:[%s219 + $0x90] sm:$0xff]
      %v244 = vld [vmem:[%s219 + $0x98] sm:$0xff]
      %v245 = vld [vmem:[%s219 + $0xa0] sm:$0xff]
      %v246 = vld [vmem:[%s219 + $0xa8] sm:$0xff]
      %v247 = vld [vmem:[%s219 + $0xb0] sm:$0xff]
      %v248 = vld [vmem:[%s219 + $0xb8] sm:$0xff]
      %v249 = vld [vmem:[%s219 + $0xc0] sm:$0xff]
      %v250 = vld [vmem:[%s219 + $0xc8] sm:$0xff]
      %v251 = vld [vmem:[%s219 + $0xd0] sm:$0xff]
      %v252 = vld [vmem:[%s219 + $0xd8] sm:$0xff]
      %v253 = vld [vmem:[%s219 + $0xe0] sm:$0xff]
      %v254 = vld [vmem:[%s219 + $0xe8] sm:$0xff]
      %v255 = vld [vmem:[%s219 + $0xf0] sm:$0xff]
      %v256 = vld [vmem:[%s219 + $0xf8] sm:$0xff]
      %v257 = vadd.f32 %v225, %v226
      %v258 = vadd.f32 %v257, %v227
      %v259 = vadd.f32 %v258, %v228
      %260 = vadd.xlane.f32.xlu0 %v259
      %v261 = vpop.xlane.xlu0 %260
      %v262 = vadd.f32 %v229, %v230
      %v263 = vadd.f32 %v262, %v231
      %v264 = vadd.f32 %v263, %v232
      %265 = vadd.xlane.f32.xlu0 %v264
      %v266 = vpop.xlane.xlu0 %265
      %v267 = vadd.f32 %v233, %v234
      %v268 = vadd.f32 %v267, %v235
      %v269 = vadd.f32 %v268, %v236
      %270 = vadd.xlane.f32.xlu0 %v269
      %v271 = vpop.xlane.xlu0 %270
      %v272 = vadd.f32 %v237, %v238
      %v273 = vadd.f32 %v272, %v239
      %v274 = vadd.f32 %v273, %v240
      %275 = vadd.xlane.f32.xlu0 %v274
      %v276 = vpop.xlane.xlu0 %275
      %v277 = vadd.f32 %v241, %v242
      %v278 = vadd.f32 %v277, %v243
      %v279 = vadd.f32 %v278, %v244
      %280 = vadd.xlane.f32.xlu0 %v279
      %v281 = vpop.xlane.xlu0 %280
      %v282 = vadd.f32 %v245, %v246
      %v283 = vadd.f32 %v282, %v247
      %v284 = vadd.f32 %v283, %v248
      %285 = vadd.xlane.f32.xlu0 %v284
      %v286 = vpop.xlane.xlu0 %285
      %v287 = vadd.f32 %v249, %v250
      %v288 = vadd.f32 %v287, %v251
      %v289 = vadd.f32 %v288, %v252
      %290 = vadd.xlane.f32.xlu0 %v289
      %v291 = vpop.xlane.xlu0 %290
      %v292 = vadd.f32 %v253, %v254
      %v293 = vadd.f32 %v292, %v255
      %v294 = vadd.f32 %v293, %v256
      %295 = vadd.xlane.f32.xlu0 %v294
      %v296 = vpop.xlane.xlu0 %295
      %v297 = vmul.f32 %v261, 0.001953125
      %v298 = vmul.f32 %v266, 0.001953125
      %v299 = vmul.f32 %v271, 0.001953125
      %v300 = vmul.f32 %v276, 0.001953125
      %v301 = vmul.f32 %v281, 0.001953125
      %v302 = vmul.f32 %v286, 0.001953125
      %v303 = vmul.f32 %v291, 0.001953125
      %v304 = vmul.f32 %v296, 0.001953125
      %v305 = vld [vmem:[%s1] sm:$0xff]
      %v306 = vld [vmem:[%s2] sm:$0xff]
      %vm307 = vcmask 523264
      %v309 = vsel %vm307, %v305, 0
      %311 = vmatprep.subr.mxu0 0.0
      %312 = vmatpush1.msra.mxu0 0.0
      %313 = vmatprep.subr.mxu0 0.0
      %314 = vmatpush1.msra.mxu0 0.0
      %315 = vmatprep.subr.mxu0 0.0
      %316 = vmatpush1.msra.mxu0 0.0
      %317 = vmatprep.subr.mxu0 0.0
      %318 = vmatpush1.msra.mxu0 0.0
      %319 = vmatprep.subr.mxu0 0.0
      %320 = vmatpush1.msra.mxu0 0.0
      %321 = vmatprep.subr.mxu0 0.0
      %322 = vmatpush1.msra.mxu0 0.0
      %323 = vmatprep.subr.mxu0 0.0
      %324 = vmatpush1.msra.mxu0 0.0
      %325 = vmatprep.subr.mxu0 0.0
      %326 = vmatpush1.msra.mxu0 0.0
      %327 = vmatprep.subr.mxu0 0.0
      %328 = vmatpush1.msra.mxu0 %v304
      %329 = vmatprep.subr.mxu0 0.0
      %330 = vmatpush1.msra.mxu0 %v303
      %331 = vmatprep.subr.mxu0 0.0
      %332 = vmatpush1.msra.mxu0 %v302
      %333 = vmatprep.subr.mxu0 0.0
      %334 = vmatpush1.msra.mxu0 %v301
      %335 = vmatprep.subr.mxu0 0.0
      %336 = vmatpush1.msra.mxu0 %v300
      %337 = vmatprep.subr.mxu0 0.0
      %338 = vmatpush1.msra.mxu0 %v299
      %339 = vmatprep.subr.mxu0 0.0
      %340 = vmatpush1.msra.mxu0 %v298
      %341 = vmatprep.subr.mxu0 0.0
      %342 = vmatpush1.msra.mxu0 %v297
      %343 = vmatprep.subr.mxu0 0.0
      %344 = vmatpush2.msra.mxu0 0.0
      %345 = vmatprep.subr.mxu0 0.0
      %346 = vmatpush2.msra.mxu0 0.0
      %347 = vmatprep.subr.mxu0 0.0
      %348 = vmatpush2.msra.mxu0 0.0
      %349 = vmatprep.subr.mxu0 0.0
      %350 = vmatpush2.msra.mxu0 0.0
      %351 = vmatprep.subr.mxu0 0.0
      %352 = vmatpush2.msra.mxu0 0.0
      %353 = vmatprep.subr.mxu0 0.0
      %354 = vmatpush2.msra.mxu0 0.0
      %355 = vmatprep.subr.mxu0 0.0
      %356 = vmatpush2.msra.mxu0 0.0
      %357 = vmatprep.subr.mxu0 0.0
      %358 = vmatpush2.msra.mxu0 0.0
      %359 = vmatprep.subr.mxu0 0.0
      %360 = vmatpush2.msra.mxu0 0.0
      %361 = vmatprep.subr.mxu0 0.0
      %362 = vmatpush2.msra.mxu0 0.0
      %363 = vmatprep.subr.mxu0 0.0
      %364 = vmatpush2.msra.mxu0 0.0
      %365 = vmatprep.subr.mxu0 0.0
      %366 = vmatpush2.msra.mxu0 0.0
      %367 = vmatprep.subr.mxu0 0.0
      %368 = vmatpush2.msra.mxu0 0.0
      %369 = vmatprep.subr.mxu0 0.0
      %370 = vmatpush2.msra.mxu0 0.0
      %371 = vmatprep.subr.mxu0 0.0
      %372 = vmatpush2.msra.mxu0 0.0
      %373 = vmatprep.subr.mxu0 0.0
      %374 = vmatpush2.msra.mxu0 0.0
      %375 = vmatprep.mubr.f32.mxu0 0.0
      %376 = vmatmul.mubr.f32.gmra.mxu0 %v309
      %v377 = vpop.f32.mrf.mxu0
      %v378 = vadd.f32 %v306, %v377
      %v379 = vpop.f32.mrf.mxu0
      %380 = vdwg.mxu0
      %v381 = vmax.f32 %v378, 0.0
      %v382 = vld [vmem:[%s3] sm:$0xff]
      %v383 = vld [vmem:[%s3 + $0x8] sm:$0xff]
      %v384 = vld [vmem:[%s3 + $0x10] sm:$0xff]
      %v385 = vld [vmem:[%s3 + $0x18] sm:$0xff]
      %v386 = vld [vmem:[%s3 + $0x20] sm:$0xff]
      %v387 = vld [vmem:[%s3 + $0x28] sm:$0xff]
      %v388 = vld [vmem:[%s3 + $0x30] sm:$0xff]
      %v389 = vld [vmem:[%s3 + $0x38] sm:$0xff]
      %v390 = vld [vmem:[%s4] sm:$0xff]
      %v391 = vld [vmem:[%s4 + $0x8] sm:$0xff]
      %v392 = vld [vmem:[%s4 + $0x10] sm:$0xff]
      %v393 = vld [vmem:[%s4 + $0x18] sm:$0xff]
      %v394 = vld [vmem:[%s4 + $0x20] sm:$0xff]
      %v395 = vld [vmem:[%s4 + $0x28] sm:$0xff]
      %v396 = vld [vmem:[%s4 + $0x30] sm:$0xff]
      %v397 = vld [vmem:[%s4 + $0x38] sm:$0xff]
      %vm398 = vcmask 64512
      %v400 = vsel %vm398, %v382, 0
      %v403 = vsel %vm398, %v383, 0
      %v406 = vsel %vm398, %v384, 0
      %v409 = vsel %vm398, %v385, 0
      %v412 = vsel %vm398, %v386, 0
      %v415 = vsel %vm398, %v387, 0
      %v418 = vsel %vm398, %v388, 0
      %v421 = vsel %vm398, %v389, 0
      %423 = vmatprep.subr.mxu0 0.0
      %424 = vmatpush1.msra.mxu0 0.0
      %425 = vmatprep.subr.mxu0 0.0
      %426 = vmatpush1.msra.mxu0 0.0
      %427 = vmatprep.subr.mxu0 0.0
      %428 = vmatpush1.msra.mxu0 0.0
      %429 = vmatprep.subr.mxu0 0.0
      %430 = vmatpush1.msra.mxu0 0.0
      %431 = vmatprep.subr.mxu0 0.0
      %432 = vmatpush1.msra.mxu0 0.0
      %433 = vmatprep.subr.mxu0 0.0
      %434 = vmatpush1.msra.mxu0 0.0
      %435 = vmatprep.subr.mxu0 0.0
      %436 = vmatpush1.msra.mxu0 0.0
      %437 = vmatprep.subr.mxu0 0.0
      %438 = vmatpush1.msra.mxu0 0.0
      %439 = vmatprep.subr.mxu0 0.0
      %440 = vmatpush1.msra.mxu0 0.0
      %441 = vmatprep.subr.mxu0 0.0
      %442 = vmatpush1.msra.mxu0 0.0
      %443 = vmatprep.subr.mxu0 0.0
      %444 = vmatpush1.msra.mxu0 0.0
      %445 = vmatprep.subr.mxu0 0.0
      %446 = vmatpush1.msra.mxu0 0.0
      %447 = vmatprep.subr.mxu0 0.0
      %448 = vmatpush1.msra.mxu0 0.0
      %449 = vmatprep.subr.mxu0 0.0
      %450 = vmatpush1.msra.mxu0 0.0
      %451 = vmatprep.subr.mxu0 0.0
      %452 = vmatpush1.msra.mxu0 0.0
      %453 = vmatprep.subr.mxu0 0.0
      %454 = vmatpush1.msra.mxu0 %v381
      %455 = vmatprep.subr.mxu0 0.0
      %456 = vmatpush2.msra.mxu0 0.0
      %457 = vmatprep.subr.mxu0 0.0
      %458 = vmatpush2.msra.mxu0 0.0
      %459 = vmatprep.subr.mxu0 0.0
      %460 = vmatpush2.msra.mxu0 0.0
      %461 = vmatprep.subr.mxu0 0.0
      %462 = vmatpush2.msra.mxu0 0.0
      %463 = vmatprep.subr.mxu0 0.0
      %464 = vmatpush2.msra.mxu0 0.0
      %465 = vmatprep.subr.mxu0 0.0
      %466 = vmatpush2.msra.mxu0 0.0
      %467 = vmatprep.subr.mxu0 0.0
      %468 = vmatpush2.msra.mxu0 0.0
      %469 = vmatprep.subr.mxu0 0.0
      %470 = vmatpush2.msra.mxu0 0.0
      %471 = vmatprep.subr.mxu0 0.0
      %472 = vmatpush2.msra.mxu0 0.0
      %473 = vmatprep.subr.mxu0 0.0
      %474 = vmatpush2.msra.mxu0 0.0
      %475 = vmatprep.subr.mxu0 0.0
      %476 = vmatpush2.msra.mxu0 0.0
      %477 = vmatprep.subr.mxu0 0.0
      %478 = vmatpush2.msra.mxu0 0.0
      %479 = vmatprep.subr.mxu0 0.0
      %480 = vmatpush2.msra.mxu0 0.0
      %481 = vmatprep.subr.mxu0 0.0
      %482 = vmatpush2.msra.mxu0 0.0
      %483 = vmatprep.subr.mxu0 0.0
      %484 = vmatpush2.msra.mxu0 0.0
      %485 = vmatprep.subr.mxu0 0.0
      %486 = vmatpush2.msra.mxu0 0.0
      %487 = vmatprep.mubr.f32.mxu0 0.0
      %488 = vmatmul.mubr.f32.gmra.mxu0 %v400
      %v489 = vpop.f32.mrf.mxu0
      %v490 = vadd.f32 %v390, %v489
      %v491 = vpop.f32.mrf.mxu0
      %492 = vmatprep.mubr.f32.mxu0 0.0
      %493 = vmatmul.mubr.f32.gmra.mxu0 %v403
      %v494 = vpop.f32.mrf.mxu0
      %v495 = vadd.f32 %v391, %v494
      %v496 = vpop.f32.mrf.mxu0
      %497 = vmatprep.mubr.f32.mxu0 0.0
      %498 = vmatmul.mubr.f32.gmra.mxu0 %v406
      %v499 = vpop.f32.mrf.mxu0
      %v500 = vadd.f32 %v392, %v499
      %v501 = vpop.f32.mrf.mxu0
      %502 = vmatprep.mubr.f32.mxu0 0.0
      %503 = vmatmul.mubr.f32.gmra.mxu0 %v409
      %v504 = vpop.f32.mrf.mxu0
      %v505 = vadd.f32 %v393, %v504
      %v506 = vpop.f32.mrf.mxu0
      %507 = vmatprep.mubr.f32.mxu0 0.0
      %508 = vmatmul.mubr.f32.gmra.mxu0 %v412
      %v509 = vpop.f32.mrf.mxu0
      %v510 = vadd.f32 %v394, %v509
      %v511 = vpop.f32.mrf.mxu0
      %512 = vmatprep.mubr.f32.mxu0 0.0
      %513 = vmatmul.mubr.f32.gmra.mxu0 %v415
      %v514 = vpop.f32.mrf.mxu0
      %v515 = vadd.f32 %v395, %v514
      %v516 = vpop.f32.mrf.mxu0
      %517 = vmatprep.mubr.f32.mxu0 0.0
      %518 = vmatmul.mubr.f32.gmra.mxu0 %v418
      %v519 = vpop.f32.mrf.mxu0
      %v520 = vadd.f32 %v396, %v519
      %v521 = vpop.f32.mrf.mxu0
      %522 = vmatprep.mubr.f32.mxu0 0.0
      %523 = vmatmul.mubr.f32.gmra.mxu0 %v421
      %v524 = vpop.f32.mrf.mxu0
      %v525 = vadd.f32 %v397, %v524
      %v526 = vpop.f32.mrf.mxu0
      %527 = vdwg.mxu0
      %v528 = vxor.u32 %v490, 2147483648
      %v529 = vxor.u32 %v495, 2147483648
      %v530 = vxor.u32 %v500, 2147483648
      %v531 = vxor.u32 %v505, 2147483648
      %v532 = vxor.u32 %v510, 2147483648
      %v533 = vxor.u32 %v515, 2147483648
      %v534 = vxor.u32 %v520, 2147483648
      %v535 = vxor.u32 %v525, 2147483648
      %v536 = vmul.f32 %v528, 1.442695
      %v537 = vpow.pop %v536
      %v538 = vmul.f32 %v529, 1.442695
      %v539 = vpow.pop %v538
      %v540 = vmul.f32 %v530, 1.442695
      %v541 = vpow.pop %v540
      %v542 = vmul.f32 %v531, 1.442695
      %v543 = vpow.pop %v542
      %v544 = vmul.f32 %v532, 1.442695
      %v545 = vpow.pop %v544
      %v546 = vmul.f32 %v533, 1.442695
      %v547 = vpow.pop %v546
      %v548 = vmul.f32 %v534, 1.442695
      %v549 = vpow.pop %v548
      %v550 = vmul.f32 %v535, 1.442695
      %v551 = vpow.pop %v550
      %v552 = vadd.f32 %v537, 1.0
      %v553 = vadd.f32 %v539, 1.0
      %v554 = vadd.f32 %v541, 1.0
      %v555 = vadd.f32 %v543, 1.0
      %v556 = vadd.f32 %v545, 1.0
      %v557 = vadd.f32 %v547, 1.0
      %v558 = vadd.f32 %v549, 1.0
      %v559 = vadd.f32 %v551, 1.0
      %v560 = vrcp.pop %v552
      %v561 = vmul.f32 1.0, %v560
      %v562 = vrcp.pop %v553
      %v563 = vmul.f32 1.0, %v562
      %v564 = vrcp.pop %v554
      %v565 = vmul.f32 1.0, %v564
      %v566 = vrcp.pop %v555
      %v567 = vmul.f32 1.0, %v566
      %v568 = vrcp.pop %v556
      %v569 = vmul.f32 1.0, %v568
      %v570 = vrcp.pop %v557
      %v571 = vmul.f32 1.0, %v570
      %v572 = vrcp.pop %v558
      %v573 = vmul.f32 1.0, %v572
      %v574 = vrcp.pop %v559
      %v575 = vmul.f32 1.0, %v574
      %577 = vset.pattern.permute.xlu0 0
      %578 = vperm.xlu0 %577, %v561
      %v579 = vpop.permute.xlu0 %578
      %582 = vset.pattern.permute.xlu0 0
      %583 = vperm.xlu0 %582, %v563
      %v584 = vpop.permute.xlu0 %583
      %587 = vset.pattern.permute.xlu0 0
      %588 = vperm.xlu0 %587, %v565
      %v589 = vpop.permute.xlu0 %588
      %592 = vset.pattern.permute.xlu0 0
      %593 = vperm.xlu0 %592, %v567
      %v594 = vpop.permute.xlu0 %593
      %597 = vset.pattern.permute.xlu0 0
      %598 = vperm.xlu0 %597, %v569
      %v599 = vpop.permute.xlu0 %598
      %602 = vset.pattern.permute.xlu0 0
      %603 = vperm.xlu0 %602, %v571
      %v604 = vpop.permute.xlu0 %603
      %607 = vset.pattern.permute.xlu0 0
      %608 = vperm.xlu0 %607, %v573
      %v609 = vpop.permute.xlu0 %608
      %612 = vset.pattern.permute.xlu0 0
      %613 = vperm.xlu0 %612, %v575
      %v614 = vpop.permute.xlu0 %613
      %v616 = vmul.f32 %v225, %v579
      %v617 = vmul.f32 %v226, %v579
      %v618 = vmul.f32 %v227, %v579
      %v619 = vmul.f32 %v228, %v579
      %v620 = vmul.f32 %v229, %v584
      %v621 = vmul.f32 %v230, %v584
      %v622 = vmul.f32 %v231, %v584
      %v623 = vmul.f32 %v232, %v584
      %v624 = vmul.f32 %v233, %v589
      %v625 = vmul.f32 %v234, %v589
      %v626 = vmul.f32 %v235, %v589
      %v627 = vmul.f32 %v236, %v589
      %v628 = vmul.f32 %v237, %v594
      %v629 = vmul.f32 %v238, %v594
      %v630 = vmul.f32 %v239, %v594
      %v631 = vmul.f32 %v240, %v594
      %v632 = vmul.f32 %v241, %v599
      %v633 = vmul.f32 %v242, %v599
      %v634 = vmul.f32 %v243, %v599
      %v635 = vmul.f32 %v244, %v599
      %v636 = vmul.f32 %v245, %v604
      %v637 = vmul.f32 %v246, %v604
      %v638 = vmul.f32 %v247, %v604
      %v639 = vmul.f32 %v248, %v604
      %v640 = vmul.f32 %v249, %v609
      %v641 = vmul.f32 %v250, %v609
      %v642 = vmul.f32 %v251, %v609
      %v643 = vmul.f32 %v252, %v609
      %v644 = vmul.f32 %v253, %v614
      %v645 = vmul.f32 %v254, %v614
      %v646 = vmul.f32 %v255, %v614
      %v647 = vmul.f32 %v256, %v614
      %648 = vst [vmem:[%s224] sm:$0xff] %v616
      %649 = vst [vmem:[%s224 + $0x8] sm:$0xff] %v617
      %650 = vst [vmem:[%s224 + $0x10] sm:$0xff] %v618
      %651 = vst [vmem:[%s224 + $0x18] sm:$0xff] %v619
      %652 = vst [vmem:[%s224 + $0x20] sm:$0xff] %v620
      %653 = vst [vmem:[%s224 + $0x28] sm:$0xff] %v621
      %654 = vst [vmem:[%s224 + $0x30] sm:$0xff] %v622
      %655 = vst [vmem:[%s224 + $0x38] sm:$0xff] %v623
      %656 = vst [vmem:[%s224 + $0x40] sm:$0xff] %v624
      %657 = vst [vmem:[%s224 + $0x48] sm:$0xff] %v625
      %658 = vst [vmem:[%s224 + $0x50] sm:$0xff] %v626
      %659 = vst [vmem:[%s224 + $0x58] sm:$0xff] %v627
      %660 = vst [vmem:[%s224 + $0x60] sm:$0xff] %v628
      %661 = vst [vmem:[%s224 + $0x68] sm:$0xff] %v629
      %662 = vst [vmem:[%s224 + $0x70] sm:$0xff] %v630
      %663 = vst [vmem:[%s224 + $0x78] sm:$0xff] %v631
      %664 = vst [vmem:[%s224 + $0x80] sm:$0xff] %v632
      %665 = vst [vmem:[%s224 + $0x88] sm:$0xff] %v633
      %666 = vst [vmem:[%s224 + $0x90] sm:$0xff] %v634
      %667 = vst [vmem:[%s224 + $0x98] sm:$0xff] %v635
      %668 = vst [vmem:[%s224 + $0xa0] sm:$0xff] %v636
      %669 = vst [vmem:[%s224 + $0xa8] sm:$0xff] %v637
      %670 = vst [vmem:[%s224 + $0xb0] sm:$0xff] %v638
      %671 = vst [vmem:[%s224 + $0xb8] sm:$0xff] %v639
      %672 = vst [vmem:[%s224 + $0xc0] sm:$0xff] %v640
      %673 = vst [vmem:[%s224 + $0xc8] sm:$0xff] %v641
      %674 = vst [vmem:[%s224 + $0xd0] sm:$0xff] %v642
      %675 = vst [vmem:[%s224 + $0xd8] sm:$0xff] %v643
      %676 = vst [vmem:[%s224 + $0xe0] sm:$0xff] %v644
      %677 = vst [vmem:[%s224 + $0xe8] sm:$0xff] %v645
      %678 = vst [vmem:[%s224 + $0xf0] sm:$0xff] %v646
      %679 = vst [vmem:[%s224 + $0xf8] sm:$0xff] %v647
      %p680 = scmp.lt.s32.totalorder %s16, 1
      %s681 = scalar_select %p680, %s16, 1
      %s682 = smul.addr %s681, 32
      %s683 = smul.addr %s682, 8
      %s684 = scalar_lea.vmem %s5, %s683
      // Predicated region
      $region41: #{channel_attention_module.1} parent=39 // pred_check
        %p685 = pneg %p144
      $region42: #{channel_attention_module.1} parent=39 // pred_check_branch
        %687 = sbr.rel (%p685) target = $region44
      $region43: #{channel_attention_module.1} parent=39 // pred_region
        _
      $region44: #{channel_attention_module.1} parent=39 // pred_fallthru
        _
    $region40: #{channel_attention_module.1} parent=5 // pred_fallthru
      _
    %p688 = scmp.le.s32.totalorder 2, %s11
    // Predicated region
    $region45: #{channel_attention_module.1} parent=5 // pred_check
      %p689 = pneg %p688
    $region46: #{channel_attention_module.1} parent=5 // pred_check_branch
      %691 = sbr.rel (%p689) target = $region48
    $region47: #{channel_attention_module.1} parent=5 // pred_region
      %s692 = ssub.s32 %s11, 2
      // Predicated region
      $region49: #{channel_attention_module.1} parent=47 // pred_check
        %p693 = pneg %p150
      $region50: #{channel_attention_module.1} parent=47 // pred_check_branch
        %695 = sbr.rel (%p693) target = $region52
      $region51: #{channel_attention_module.1} parent=47 // pred_region
        %p696 = scmp.lt.s32.totalorder %s17, 1
        %s697 = scalar_select %p696, %s17, 1
        %s698 = smul.addr %s697, 32
        %s699 = smul.addr %s698, 8
        %s700 = scalar_lea.vmem %s5, %s699
      $region52: #{channel_attention_module.1} parent=47 // pred_fallthru
        _
    $region48: #{channel_attention_module.1} parent=5 // pred_fallthru
      _
  $region6: #{channel_attention_module.1} parent=0 // loop_footer
    %s15 = sadd.s32 1, %s11
  $region7: #{channel_attention_module.1} parent=0 // loop_footer_branch
    %10 = sbr.rel target = $region3
  $region8: #{channel_attention_module.1} parent=0 // loop_exit
    _

</llo_original>
